<compile_context>
chip_gen: v5e
topology: v5e:2x2
jax: 0.10.0
libtpu: 0.0.40
codegen_flags: <defaults>
</compile_context>

<pallas_src>
import functools
import math

import jax
import jax.numpy as jnp
from jax.experimental import pallas as pl
from jax.experimental.pallas import tpu as pltpu


def _round_up(n: int, m: int) -> int:
    return ((n + m - 1) // m) * m


def _sublane_multiple(dtype) -> int:
    # Rows per vreg sublane group: 8 for 32-bit, 16 for 16-bit, 32 for 8-bit.
    itemsize = jnp.dtype(dtype).itemsize
    return max(8, 32 // max(1, itemsize))


def _choose_rows_block(rows: int, d_model: int, sublane: int) -> int:
    # Target ~6 MiB of f32-equivalent working set per block (the f32 upcast of
    # the input tile dominates). Clamp by bytes, not a hard row cap.
    target_elems = (6 * 1024 * 1024) // 4
    blk = max(1, target_elems // d_model)
    blk = max(sublane, (blk // sublane) * sublane)

    if rows <= sublane:
        # Tiny inputs: a single block equal to the full row extent is allowed
        # (block dim == full array dim).
        return rows

    # Ensure the grid has >= 2 steps when rows allow it, so the parallel row
    # axis can shard across v7x's two TensorCores.
    half = max(sublane, _round_up(pl.cdiv(rows, 2), sublane))
    blk = min(blk, half)
    # Never larger than the (sublane-rounded) row extent.
    blk = min(blk, _round_up(rows, sublane))
    return blk


def _rmsnorm_kernel(x_ref, w_ref, o_ref, *, eps: float, inv_d: float):
    # x_ref: (rows_block, d_model) in VMEM; w_ref: (1, d_model) in VMEM.
    x = x_ref[...].astype(jnp.float32)
    # Sum of squares over the feature axis; the lane extent is exactly d_model
    # (full array dim), so no masking is required. Multiply by the compile-time
    # 1/d_model instead of dividing.
    ss = jnp.sum(x * x, axis=-1, keepdims=True)          # (rows_block, 1)
    inv = jax.lax.rsqrt(ss * inv_d + eps)                # rsqrt -> EUP slot
    w = w_ref[...].astype(jnp.float32)                   # (1, d_model)
    o_ref[...] = (x * inv * w).astype(o_ref.dtype)


def rmsnorm(x, weight, eps: float = 1e-5, rows_block: int | None = None):
    """RMSNorm over the last axis of x, scaled by `weight` (shape (d_model,))."""
    orig_shape = x.shape
    d_model = orig_shape[-1]
    rows = math.prod(orig_shape[:-1]) if len(orig_shape) > 1 else 1

    x2d = x.reshape(rows, d_model)
    w2d = weight.reshape(1, d_model)

    if rows_block is None:
        rows_block = _choose_rows_block(rows, d_model, _sublane_multiple(x.dtype))
    rows_block = min(rows_block, rows) if rows < rows_block else rows_block

    grid = (pl.cdiv(rows, rows_block),)

    out = pl.pallas_call(
        functools.partial(_rmsnorm_kernel, eps=eps, inv_d=1.0 / d_model),
        out_shape=jax.ShapeDtypeStruct((rows, d_model), x.dtype),
        grid_spec=pltpu.PrefetchScalarGridSpec(
            num_scalar_prefetch=0,
            grid=grid,
            in_specs=[
                pl.BlockSpec((rows_block, d_model), lambda i: (i, 0)),
                pl.BlockSpec((1, d_model), lambda i: (0, 0)),  # weight stays resident
            ],
            out_specs=pl.BlockSpec((rows_block, d_model), lambda i: (i, 0)),
        ),
        compiler_params=pltpu.CompilerParams(
            dimension_semantics=("parallel",),
            vmem_limit_bytes=64 << 20,  # v5e's 16 MiB scoped default is too small
        ),
    )(x2d, w2d)

    return out.reshape(orig_shape)


if __name__ == "__main__":
    batch, seq, d_model = 2, 8, 32
    key = jax.random.PRNGKey(0)
    x = jax.random.normal(key, (batch, seq, d_model), dtype=jnp.float32)
    # nn.Parameter(torch.ones(d_model)) -> deterministic ones init
    weight = jnp.ones((d_model,), dtype=jnp.float32)

    out = rmsnorm(x, weight, eps=1e-5)
    out = jax.block_until_ready(out)

    # Reference check (plain JAX, matches PyTorch RMSNorm forward semantics).
    ref = x * jax.lax.rsqrt(jnp.mean(x * x, axis=-1, keepdims=True) + 1e-5) * weight
    assert out.shape == x.shape
    assert jnp.allclose(out, ref, atol=1e-5, rtol=1e-5), (
        float(jnp.max(jnp.abs(out - ref)))
    )
    print("KERNEL_OK")
</pallas_src>

<mosaic_0001>
module attributes {stable_mosaic.version = 11 : i64} {
  func.func @_rmsnorm_kernel(%arg0: i32, %arg1: memref<8x32xf32, #tpu.memory_space<vmem>>, %arg2: memref<1x32xf32, #tpu.memory_space<vmem>>, %arg3: memref<8x32xf32, #tpu.memory_space<vmem>>) attributes {dimension_semantics = [#tpu.dimension_semantics<parallel>], iteration_bounds = array<i64: 2>, scalar_prefetch = 0 : i64, scratch_operands = 0 : i64, tpu.core_type = #tpu.core_type<tc>, window_params = [{transform_indices = @transform_0, window_bounds = array<i64: 8, 32>}, {pipeline_mode = #tpu.pipeline_mode<synchronous>, transform_indices = @transform_1, window_bounds = array<i64: 1, 32>}, {transform_indices = @transform_2, window_bounds = array<i64: 8, 32>}]} {
    %c0 = arith.constant 0 : index
    %c0_0 = arith.constant 0 : index
    %0 = vector.load %arg1[%c0, %c0_0] : memref<8x32xf32, #tpu.memory_space<vmem>>, vector<8x32xf32>
    %1 = arith.mulf %0, %0 : vector<8x32xf32>
    %cst = arith.constant dense<0.000000e+00> : vector<8xf32>
    %2 = vector.multi_reduction <add>, %1, %cst [1] : vector<8x32xf32> to vector<8xf32>
    %3 = vector.shape_cast %2 : vector<8xf32> to vector<8x1xf32>
    %cst_1 = arith.constant 3.125000e-02 : f32
    %4 = vector.broadcast %cst_1 : f32 to vector<8x1xf32>
    %5 = arith.mulf %3, %4 : vector<8x1xf32>
    %cst_2 = arith.constant 9.99999974E-6 : f32
    %6 = vector.broadcast %cst_2 : f32 to vector<8x1xf32>
    %7 = arith.addf %5, %6 : vector<8x1xf32>
    %8 = math.rsqrt %7 : vector<8x1xf32>
    %c0_3 = arith.constant 0 : index
    %c0_4 = arith.constant 0 : index
    %9 = vector.load %arg2[%c0_3, %c0_4] : memref<1x32xf32, #tpu.memory_space<vmem>>, vector<1x32xf32>
    %10 = vector.broadcast %8 : vector<8x1xf32> to vector<8x32xf32>
    %11 = arith.mulf %0, %10 : vector<8x32xf32>
    %12 = vector.broadcast %9 : vector<1x32xf32> to vector<8x32xf32>
    %13 = arith.mulf %11, %12 : vector<8x32xf32>
    %c0_5 = arith.constant 0 : index
    %c0_6 = arith.constant 0 : index
    %14 = vector.load %arg3[%c0_5, %c0_6] : memref<8x32xf32, #tpu.memory_space<vmem>>, vector<8x32xf32>
    tpu.vector_store %arg3[%c0_5, %c0_6], %13 {strides = array<i32>} : memref<8x32xf32, #tpu.memory_space<vmem>>, vector<8x32xf32>,
    return
  }
  func.func @transform_0(%arg0: i32) -> (i32, i32) {
    %c0_i32 = arith.constant 0 : i32
    %c0_i32_0 = arith.constant 0 : i32
    return %arg0, %c0_i32 : i32, i32
  }
  func.func @transform_1(%arg0: i32) -> (i32, i32) {
    %c0_i32 = arith.constant 0 : i32
    %c0_i32_0 = arith.constant 0 : i32
    %c0_i32_1 = arith.constant 0 : i32
    return %c0_i32, %c0_i32_0 : i32, i32
  }
  func.func @transform_2(%arg0: i32) -> (i32, i32) {
    %c0_i32 = arith.constant 0 : i32
    %c0_i32_0 = arith.constant 0 : i32
    return %arg0, %c0_i32 : i32, i32
  }
}

</mosaic_0001>

<llo_original>
// kernel: tpu_custom_call.1
$region0: #{tpu_custom_call.1}
  #allocation0 [shape = 'u32[]', space=smem, size = 0x4, offset = 0x4, fixed_abs, tag = 'smem constant byte address 0x4 - core index']
  #allocation1 [shape = 'u32[72,128]{1,0:T(1,128)}', space=vmem, size = 0x9000, scoped, tag = 'internal scratch']
  %s0 = inlined_call_operand.hbm [shape: f32[16,32], index: 0, kind: input, shape index: {}]
  %s1 = inlined_call_operand.hbm [shape: f32[1,32], index: 1, kind: input, shape index: {}]
  %s2 = inlined_call_operand.hbm [shape: f32[16,32], index: 2, kind: output, shape index: {}]
  %s3 = sld [smem:[#allocation0]]
  $region49: #{tpu_custom_call.1} parent=0
    _
  %s5 = ssub.s32 1, %s3
  %s6 = scalar_select 0, %s5, %s3
  $region1: #{tpu_custom_call.1} parent=0
    #allocation2 [shape = 'u8[8192]{0}', space=vmem, size = 0x2000, scoped, tag = 'input window, operand 0']
    #allocation3 [shape = 's32[2]{0}', space=sflag, size = 0x8, scoped, tag = 'scoped memory for tpu_custom_call.1']
    #allocation4 [shape = 's32[2]{0}', space=sflag, size = 0x8, scoped, tag = 'scoped memory for tpu_custom_call.1']
    #allocation5 [shape = 'u8[512]{0}', space=vmem, size = 0x400, scoped, tag = 'input window, operand 1, single buffered']
    #allocation6 [shape = 's32[1]{0}', space=sflag, size = 0x4, scoped, tag = 'scoped memory for tpu_custom_call.1']
    #allocation7 [shape = 'u8[8192]{0}', space=vmem, size = 0x2000, scoped, tag = 'output window, operand 0']
    %7 = vsyncpa [#allocation3], 0
    %s8 = scalar_lea.sflag [#allocation3], 1
    %9 = vsyncpa %s8, 0
    %10 = vsyncpa [#allocation6], 0
    %11 = vsyncpa [#allocation4], 0
    %s12 = scalar_lea.sflag [#allocation4], 1
    %13 = vsyncpa %s12, 0
    loop: start=0, step=1, limit=4
    $region2: #{tpu_custom_call.1} parent=1 // loop_pre_header
      _
    $region3: #{tpu_custom_call.1} parent=1 // loop_header
      %s15 = sphi 0, %s19
      %p16 = scmp.ge.s32.totalorder %s15, 4
      %s25 = sphi 0, %s27
      %s28 = sphi 0, %s25
      %s29 = sphi 0, %s28
      %s45 = sphi 0, %s29
      %s49 = sphi 0, %s49
      %s51 = sphi 0, %s49
      %s52 = sphi 0, %s51
      %s66 = sphi 0, %s52
      %s72 = sphi 0, %s74
      %s75 = sphi 0, %s72
      %s76 = sphi 0, %s75
      %s92 = sphi 0, %s76
    $region4: #{tpu_custom_call.1} parent=1 // loop_header_branch
      %18 = sbr.rel (%p16) target = $region8
    $region5: #{tpu_custom_call.1} parent=1 // loop_body
      %s20 = ssub.s32 %s15, 1
      %s21 = ssub.s32 %s15, 2
      %s22 = sadd.s32 %s15, 1
      %s23 = ssub.s32 %s15, %s22
      %p24 = scmp.eq.s32.totalorder %s23, 0
      %s26 = sadd.s32 %s25, 1
      %s27 = scalar_select %p24, %s25, %s26
      %p30 = pneg %p24
      %p31 = scmp.eq.s32.totalorder %s15, 1
      %p32 = por %p30, %p31
      %p33 = scmp.ne.s32.totalorder %s25, %s28
      %p34 = scmp.eq.s32.totalorder %s15, 0
      %p35 = por %p33, %p34
      %p36 = scmp.ne.s32.totalorder %s25, %s28
      %p37 = scmp.eq.s32.totalorder %s20, 1
      %p38 = por %p36, %p37
      %p39 = scmp.ne.s32.totalorder %s28, %s29
      %p40 = scmp.eq.s32.totalorder %s20, 0
      %p41 = por %p39, %p40
      %p42 = scmp.ne.s32.totalorder %s28, %s29
      %p43 = scmp.eq.s32.totalorder %s21, 1
      %p44 = por %p42, %p43
      %p46 = scmp.ne.s32.totalorder %s29, %s45
      %p47 = scmp.eq.s32.totalorder %s21, 0
      %p48 = por %p46, %p47
      %s50 = sadd.s32 %s49, 1
      %p53 = scmp.eq.s32.totalorder %s15, 1
      %p54 = scmp.ne.s32.totalorder %s49, %s51
      %p55 = scmp.eq.s32.totalorder %s15, 0
      %p56 = por %p54, %p55
      %p57 = scmp.ne.s32.totalorder %s49, %s51
      %p58 = scmp.eq.s32.totalorder %s20, 1
      %p59 = por %p57, %p58
      %p60 = scmp.ne.s32.totalorder %s51, %s52
      %p61 = scmp.eq.s32.totalorder %s20, 0
      %p62 = por %p60, %p61
      %p63 = scmp.ne.s32.totalorder %s51, %s52
      %p64 = scmp.eq.s32.totalorder %s21, 1
      %p65 = por %p63, %p64
      %p67 = scmp.ne.s32.totalorder %s52, %s66
      %p68 = scmp.eq.s32.totalorder %s21, 0
      %p69 = por %p67, %p68
      %s70 = ssub.s32 %s15, %s22
      %p71 = scmp.eq.s32.totalorder %s70, 0
      %s73 = sadd.s32 %s72, 1
      %s74 = scalar_select %p71, %s72, %s73
      %p77 = pneg %p71
      %p78 = scmp.eq.s32.totalorder %s15, 1
      %p79 = por %p77, %p78
      %p80 = scmp.ne.s32.totalorder %s72, %s75
      %p81 = scmp.eq.s32.totalorder %s15, 0
      %p82 = por %p80, %p81
      %p83 = scmp.ne.s32.totalorder %s72, %s75
      %p84 = scmp.eq.s32.totalorder %s20, 1
      %p85 = por %p83, %p84
      %p86 = scmp.ne.s32.totalorder %s75, %s76
      %p87 = scmp.eq.s32.totalorder %s20, 0
      %p88 = por %p86, %p87
      %p89 = scmp.ne.s32.totalorder %s75, %s76
      %p90 = scmp.eq.s32.totalorder %s21, 1
      %p91 = por %p89, %p90
      %p93 = scmp.ne.s32.totalorder %s76, %s92
      %p94 = scmp.eq.s32.totalorder %s21, 0
      %p95 = por %p93, %p94
      %p96 = scmp.le.s32.totalorder 1, %s15
      %p97 = scmp.lt.s32.totalorder %s15, 3
      %p98 = pnand %p96, %p97
      %p99 = pneg %p98
      // Predicated region
      $region9: #{tpu_custom_call.1} parent=5 // pred_check
        _
      $region10: #{tpu_custom_call.1} parent=5 // pred_check_branch
        %101 = sbr.rel (%p98) target = $region12
      $region11: #{tpu_custom_call.1} parent=5 // pred_region
        %s102 = ssub.s32 %s15, 1
        // Predicated region
        $region13: #{tpu_custom_call.1} parent=11 // pred_check
          %p103 = pneg %p62
        $region14: #{tpu_custom_call.1} parent=11 // pred_check_branch
          %105 = sbr.rel (%p103) target = $region16
        $region15: #{tpu_custom_call.1} parent=11 // pred_region
          %107 = vsyncadd [#allocation6], 0
          %s109 = sshll.u32 %s1, 4
          %s110 = int_to_ptr.hbm [resolvable:$true] %s109
          %s111 = sshll.u32 [#allocation5], 4
          %s112 = int_to_ptr.vmem [resolvable:$true] %s111
          %114 = dma.hbm_to_vmem [thread:$0]  %s110, 16, %s112, [#allocation6]
        $region16: #{tpu_custom_call.1} parent=11 // pred_fallthru
          _
      $region12: #{tpu_custom_call.1} parent=5 // pred_fallthru
        _
      %p115 = scmp.lt.s32.totalorder %s15, 2
      // Predicated region
      $region17: #{tpu_custom_call.1} parent=5 // pred_check
        %p116 = pneg %p115
      $region18: #{tpu_custom_call.1} parent=5 // pred_check_branch
        %118 = sbr.rel (%p116) target = $region20
      $region19: #{tpu_custom_call.1} parent=5 // pred_region
        // Predicated region
        $region21: #{tpu_custom_call.1} parent=19 // pred_check
          %p119 = pneg %p35
        $region22: #{tpu_custom_call.1} parent=19 // pred_check_branch
          %121 = sbr.rel (%p119) target = $region24
        $region23: #{tpu_custom_call.1} parent=19 // pred_region
          %s122 = sand.u32 %s25, 1
          %s123 = scalar_lea.sflag [#allocation3], %s122
          %s124 = sand.u32 %s25, 1
          %s125 = smul.addr %s124, 8
          %s126 = scalar_lea.vmem [#allocation2], %s125
          %128 = vsyncadd %s123, 0
          %s129 = smul.addr %s15, 8
          %s130 = scalar_lea.hbm %s0, %s129
          %s132 = sshll.u32 %s130, 4
          %s133 = int_to_ptr.hbm [resolvable:$true] %s132
          %s134 = sshll.u32 %s126, 4
          %s135 = int_to_ptr.vmem [resolvable:$true] %s134
          %137 = dma.hbm_to_vmem [thread:$0]  %s133, 128, %s135, %s123
        $region24: #{tpu_custom_call.1} parent=19 // pred_fallthru
          _
      $region20: #{tpu_custom_call.1} parent=5 // pred_fallthru
        _
      %p138 = scmp.le.s32.totalorder 1, %s15
      %p139 = scmp.lt.s32.totalorder %s15, 3
      %p140 = pnand %p138, %p139
      %p141 = pneg %p140
      // Predicated region
      $region25: #{tpu_custom_call.1} parent=5 // pred_check
        _
      $region26: #{tpu_custom_call.1} parent=5 // pred_check_branch
        %143 = sbr.rel (%p140) target = $region28
      $region27: #{tpu_custom_call.1} parent=5 // pred_region
        %s144 = ssub.s32 %s15, 1
        %s145 = sand.u32 %s28, 1
        %s146 = scalar_lea.sflag [#allocation3], %s145
        %s147 = sand.u32 %s28, 1
        %s148 = smul.addr %s147, 8
        %s149 = scalar_lea.vmem [#allocation2], %s148
        // Predicated region
        $region29: #{tpu_custom_call.1} parent=27 // pred_check
          %p150 = pneg %p41
        $region30: #{tpu_custom_call.1} parent=27 // pred_check_branch
          %152 = sbr.rel (%p150) target = $region32
        $region31: #{tpu_custom_call.1} parent=27 // pred_region
          %154 = dma.done %s146, 128
        $region32: #{tpu_custom_call.1} parent=27 // pred_fallthru
          _
        // Predicated region
        $region33: #{tpu_custom_call.1} parent=27 // pred_check
          %p155 = pneg %p62
        $region34: #{tpu_custom_call.1} parent=27 // pred_check_branch
          %157 = sbr.rel (%p155) target = $region36
        $region35: #{tpu_custom_call.1} parent=27 // pred_region
          %159 = dma.done [#allocation6], 16
        $region36: #{tpu_custom_call.1} parent=27 // pred_fallthru
          _
        %s160 = sand.u32 %s28, 1
        %s161 = scalar_lea.sflag [#allocation3], %s160
        %s162 = sand.u32 %s28, 1
        %s163 = smul.addr %s162, 8
        %s164 = scalar_lea.vmem [#allocation2], %s163
        %p165 = pneg %p41
        %p166 = pneg %p38
        %p167 = pneg %p62
        %p168 = pneg %p59
        %p169 = pneg %p88
        %p170 = pneg %p85
        %s171 = sand.u32 %s75, 1
        %s172 = scalar_lea.sflag [#allocation4], %s171
        %s173 = sand.u32 %s75, 1
        %s174 = smul.addr %s173, 8
        %s175 = scalar_lea.vmem [#allocation7], %s174
        %v176 = vld [vmem:[%s149] sm:$0xff]
        %v177 = vmul.f32 %v176, %v176
        %vm178 = vcmask 261120
        %v179 = vsel %vm178, %v177, 0.0
        %180 = vadd.xlane.f32.xlu0 %v179
        %v181 = vpop.xlane.xlu0 %180
        %v182 = vmul.f32 %v181, 0.03125
        %v183 = vadd.f32 %v182, 1e-05
        %v184 = vrsqrt.pop %v183
        %v185 = vmul.f32 %v184, %v183
        %v186 = vmul.f32 %v185, %v184
        %v187 = vmul.f32 0.5, %v186
        %v188 = vsub.f32 1.5, %v187
        %v189 = vmul.f32 %v184, %v188
        %vm190 = vweird.f32 %v183
        %vm191 = vweird.f32 %v184
        %vm192 = vmor %vm190, %vm191
        %v193 = vsel %vm192, %v184, %v189
        %v194 = vld [vmem:[#allocation5] sm:$0x1]
        %v195 = vmul.f32 %v176, %v193
        %v197 = vperm.slane %v194, 0
        %v199 = vmul.f32 %v195, %v197
        %200 = vst.msk [vmem:[%s175] sm:$0xff] %vm178, %v199
        %s201 = sand.u32 %s75, 1
        %s202 = scalar_lea.sflag [#allocation4], %s201
        %s203 = sand.u32 %s75, 1
        %s204 = smul.addr %s203, 8
        %s205 = scalar_lea.vmem [#allocation7], %s204
        // Predicated region
        $region37: #{tpu_custom_call.1} parent=27 // pred_check
          %p206 = pneg %p85
        $region38: #{tpu_custom_call.1} parent=27 // pred_check_branch
          %208 = sbr.rel (%p206) target = $region40
        $region39: #{tpu_custom_call.1} parent=27 // pred_region
          %210 = vsyncadd %s202, 0
          %s211 = smul.addr %s20, 8
          %s212 = scalar_lea.hbm %s2, %s211
          %s214 = sshll.u32 %s205, 4
          %s215 = int_to_ptr.vmem [resolvable:$true] %s214
          %s216 = sshll.u32 %s212, 4
          %s217 = int_to_ptr.hbm [resolvable:$true] %s216
          %219 = dma.vmem_to_hbm [thread:$0]  %s215, 128, %s217, %s202
        $region40: #{tpu_custom_call.1} parent=27 // pred_fallthru
          _
      $region28: #{tpu_custom_call.1} parent=5 // pred_fallthru
        _
      %p220 = scmp.le.s32.totalorder 2, %s15
      // Predicated region
      $region41: #{tpu_custom_call.1} parent=5 // pred_check
        %p221 = pneg %p220
      $region42: #{tpu_custom_call.1} parent=5 // pred_check_branch
        %223 = sbr.rel (%p221) target = $region44
      $region43: #{tpu_custom_call.1} parent=5 // pred_region
        %s224 = ssub.s32 %s15, 2
        // Predicated region
        $region45: #{tpu_custom_call.1} parent=43 // pred_check
          %p225 = pneg %p91
        $region46: #{tpu_custom_call.1} parent=43 // pred_check_branch
          %227 = sbr.rel (%p225) target = $region48
        $region47: #{tpu_custom_call.1} parent=43 // pred_region
          %s228 = sand.u32 %s76, 1
          %s229 = scalar_lea.sflag [#allocation4], %s228
          %s230 = sand.u32 %s76, 1
          %s231 = smul.addr %s230, 8
          %s232 = scalar_lea.vmem [#allocation7], %s231
          %234 = dma.done %s229, 128
        $region48: #{tpu_custom_call.1} parent=43 // pred_fallthru
          _
      $region44: #{tpu_custom_call.1} parent=5 // pred_fallthru
        _
    $region6: #{tpu_custom_call.1} parent=1 // loop_footer
      %s19 = sadd.s32 1, %s15
    $region7: #{tpu_custom_call.1} parent=1 // loop_footer_branch
      %14 = sbr.rel target = $region3
    $region8: #{tpu_custom_call.1} parent=1 // loop_exit
      _
    %235 = vsyncpa [#allocation3], 1
    %s236 = scalar_lea.sflag [#allocation3], 1
    %237 = vsyncpa %s236, 1
    %238 = vsyncpa [#allocation6], 1
    %239 = vsyncpa [#allocation4], 1
    %s240 = scalar_lea.sflag [#allocation4], 1
    %241 = vsyncpa %s240, 1

</llo_original>
